<compile_context>
chip_gen: v6e
topology: v6e:2x2x1
jax: 0.10.0
libtpu: 0.0.40
codegen_flags: <defaults>
</compile_context>

<pallas_src>
from functools import partial

import jax
import jax.numpy as jnp
from jax import lax
from jax.experimental import pallas as pl
from jax.experimental.pallas import tpu as pltpu

_SUB = 512        # in-kernel sub-chunk (lanes): live set stays inside 64 vregs
_MAX_TILE = 8192  # per-grid-step batch tile (lanes)
_OUT_PAD = 8      # fc3 output rows padded 7 -> 8 for unmasked sublane stores


def _round_up(n, m):
    return ((n + m - 1) // m) * m


def _make_kernel(sub_n, n_sub, compute_dtype):
    def kernel(x_ref, wc_ref, bc_ref, w1_ref, b1_ref, w2_ref, b2_ref,
               w3_ref, b3_ref, o_ref):
        # Tiny weights/biases are VMEM-resident (constant index_map); read once
        # per grid step and kept for the whole sub-chunk loop.
        wc = wc_ref[...]
        bc = bc_ref[...]
        w1 = w1_ref[...]
        b1 = b1_ref[...]
        w2 = w2_ref[...]
        b2 = b2_ref[...]
        w3 = w3_ref[...]
        b3 = b3_ref[...]

        def body(s, carry):
            i = pl.multiple_of(s * sub_n, sub_n)
            x = x_ref[:, pl.ds(i, sub_n)].astype(compute_dtype)
            # conv1 (as matmul) + ReLU                       -> (16, sub_n)
            h = jnp.dot(wc, x, preferred_element_type=jnp.float32)
            h = jnp.maximum(h + bc, 0.0)
            # fc1 + ReLU                                     -> (32, sub_n)
            h = jnp.dot(w1, h.astype(compute_dtype),
                        preferred_element_type=jnp.float32)
            h = jnp.maximum(h + b1, 0.0)
            # fc2 + ReLU                                     -> (32, sub_n)
            h = jnp.dot(w2, h.astype(compute_dtype),
                        preferred_element_type=jnp.float32)
            h = jnp.maximum(h + b2, 0.0)
            # dropout(p=0.3): inference mode -> identity
            # TODO(synk): training-mode dropout (stochastic mask) not implemented.
            # fc3 (rows padded to 8)                         -> (8, sub_n)
            o = jnp.dot(w3, h.astype(compute_dtype),
                        preferred_element_type=jnp.float32) + b3
            o_ref[:, pl.ds(i, sub_n)] = o
            return carry

        lax.fori_loop(0, n_sub, body, 0, unroll=True)

    return kernel


def _prep_params(params, compute_dtype):
    wc, bc, w1, b1, w2, b2, w3, b3 = params
    # fc3 rows padded 7 -> 8 so the final store is a full-sublane unmasked vst.
    w3 = jnp.pad(w3, ((0, _OUT_PAD - w3.shape[0]), (0, 0)))
    b3 = jnp.pad(b3, ((0, _OUT_PAD - b3.shape[0]), (0, 0)))
    # Weights cast to the compute dtype once here (not per tile); biases stay
    # f32 because they are added to the f32 MXU accumulator.
    cast = lambda w: w.astype(compute_dtype)
    return (cast(wc), bc, cast(w1), b1, cast(w2), b2, cast(w3), b3)


def _cnn_forward_padded(x_fm, params, compute_dtype):
    """x_fm: (4, N) feature-major. Returns (8, Npad); rows 0:7, cols 0:N valid."""
    N = x_fm.shape[1]
    weights = _prep_params(params, compute_dtype)

    nr = _round_up(max(N, 1), 128)
    if nr <= _SUB:
        tile_n, sub_n = nr, nr          # single lane-dense tile, one sub-chunk
    else:
        # >=2 grid steps when possible (keeps both v7x TCs busy); tile is a
        # multiple of the 512-lane sub-chunk, capped at _MAX_TILE lanes.
        steps = max(2, pl.cdiv(nr, _MAX_TILE))
        tile_n = min(_MAX_TILE, _round_up(pl.cdiv(nr, steps), _SUB))
        sub_n = _SUB
    n_pad = _round_up(max(N, 1), tile_n)
    n_sub = tile_n // sub_n
    grid = (n_pad // tile_n,)

    if n_pad != N:
        x_fm = jnp.pad(x_fm, ((0, 0), (0, n_pad - N)))

    def resident(a):
        # Full-array block, same block every step -> stays VMEM-resident.
        return pl.BlockSpec(a.shape, lambda i: (0, 0))

    flops = 2 * (16 * 4 + 32 * 16 + 32 * 32 + _OUT_PAD * 32) * n_pad
    bytes_accessed = (4 * n_pad * x_fm.dtype.itemsize
                      + _OUT_PAD * n_pad * 4
                      + sum(w.size * w.dtype.itemsize for w in weights))

    out = pl.pallas_call(
        _make_kernel(sub_n, n_sub, compute_dtype),
        out_shape=jax.ShapeDtypeStruct((_OUT_PAD, n_pad), jnp.float32),
        grid=grid,
        in_specs=[pl.BlockSpec((4, tile_n), lambda i: (0, i))]
                 + [resident(a) for a in weights],
        out_specs=pl.BlockSpec((_OUT_PAD, tile_n), lambda i: (0, i)),
        compiler_params=pltpu.CompilerParams(
            dimension_semantics=("parallel",),
            vmem_limit_bytes=32 * 1024 * 1024),
        cost_estimate=pl.CostEstimate(flops=flops, transcendentals=0,
                                      bytes_accessed=bytes_accessed),
    )(x_fm, *weights)
    return out


def cnn_forward_feature_major(x_fm, params, *, compute_dtype=jnp.float32):
    """Feature-major entry point: x_fm (4, N) -> (7, N). No wrapper transposes."""
    out = _cnn_forward_padded(x_fm, params, compute_dtype)
    return out[:7, :x_fm.shape[1]]


@partial(jax.jit, static_argnames=("compute_dtype",))
def cnn_forward(x_nchw, params, *, compute_dtype=jnp.float32):
    """x_nchw: (N, 1, 2, 2) float32 -> (N, 7) logits (PyTorch module semantics)."""
    N = x_nchw.shape[0]
    # Layout plumbing (jitted so reshape+transpose+pad fuse into one copy each
    # direction). Callers that can keep a feature-major (4,N)/(7,N) layout
    # should call cnn_forward_feature_major and skip these passes entirely.
    x_fm = x_nchw.reshape(N, 4).T
    out = _cnn_forward_padded(x_fm, params, compute_dtype)
    return out[:7, :N].T


def init_params(key):
    """Deterministic init matching the PyTorch module's shapes (feature-major)."""
    ks = jax.random.split(key, 8)

    def uniform(k, shape, fan_in):
        bound = 1.0 / jnp.sqrt(jnp.float32(fan_in))
        return jax.random.uniform(k, shape, jnp.float32, -bound, bound)

    # conv1: weight (16,1,2,2) -> matmul form (16, 4); bias (16,1)
    wc = uniform(ks[0], (16, 1, 2, 2), 4).reshape(16, 4)
    bc = uniform(ks[1], (16, 1), 4)
    w1 = uniform(ks[2], (32, 16), 16)
    b1 = uniform(ks[3], (32, 1), 16)
    w2 = uniform(ks[4], (32, 32), 32)
    b2 = uniform(ks[5], (32, 1), 32)
    w3 = uniform(ks[6], (7, 32), 32)
    b3 = uniform(ks[7], (7, 1), 32)
    return (wc, bc, w1, b1, w2, b2, w3, b3)


def reference_forward(x_nchw, params):
    (wc, bc, w1, b1, w2, b2, w3, b3) = params
    h = x_nchw.reshape(x_nchw.shape[0], 4)
    h = jnp.maximum(h @ wc.T + bc.T, 0.0)
    h = jnp.maximum(h @ w1.T + b1.T, 0.0)
    h = jnp.maximum(h @ w2.T + b2.T, 0.0)
    return h @ w3.T + b3.T


if __name__ == "__main__":
    key = jax.random.PRNGKey(0)
    kx, kp = jax.random.split(key)
    x = jax.random.normal(kx, (2, 1, 2, 2), jnp.float32)     # NCHW, batch=2
    params = init_params(kp)

    out = jax.block_until_ready(cnn_forward(x, params))
    ref = reference_forward(x, params)
    assert out.shape == (2, 7)
    assert jnp.allclose(out, ref, atol=1e-5, rtol=1e-5)

    # Feature-major entry point (no wrapper transposes) must agree too.
    out_fm = jax.block_until_ready(
        cnn_forward_feature_major(x.reshape(2, 4).T, params))
    assert out_fm.shape == (7, 2)
    assert jnp.allclose(out_fm.T, ref, atol=1e-5, rtol=1e-5)

    # Optional bf16 MXU path (f32 accumulation): looser tolerance.
    out_bf16 = jax.block_until_ready(
        cnn_forward(x, params, compute_dtype=jnp.bfloat16))
    assert jnp.allclose(out_bf16, ref, atol=1e-1, rtol=1e-1)

    print("KERNEL_OK")
</pallas_src>

<mosaic_0001>
module attributes {stable_mosaic.version = 11 : i64} {
  func.func @kernel(%arg0: i32, %arg1: memref<4x128xf32, #tpu.memory_space<vmem>>, %arg2: memref<16x4xf32, #tpu.memory_space<vmem>>, %arg3: memref<16x1xf32, #tpu.memory_space<vmem>>, %arg4: memref<32x16xf32, #tpu.memory_space<vmem>>, %arg5: memref<32x1xf32, #tpu.memory_space<vmem>>, %arg6: memref<32x32xf32, #tpu.memory_space<vmem>>, %arg7: memref<32x1xf32, #tpu.memory_space<vmem>>, %arg8: memref<8x32xf32, #tpu.memory_space<vmem>>, %arg9: memref<8x1xf32, #tpu.memory_space<vmem>>, %arg10: memref<8x128xf32, #tpu.memory_space<vmem>>) attributes {dimension_semantics = [#tpu.dimension_semantics<parallel>], iteration_bounds = array<i64: 1>, scalar_prefetch = 0 : i64, scratch_operands = 0 : i64, tpu.core_type = #tpu.core_type<tc>, window_params = [{transform_indices = @transform_0, window_bounds = array<i64: 4, 128>}, {pipeline_mode = #tpu.pipeline_mode<synchronous>, transform_indices = @transform_1, window_bounds = array<i64: 16, 4>}, {pipeline_mode = #tpu.pipeline_mode<synchronous>, transform_indices = @transform_2, window_bounds = array<i64: 16, 1>}, {pipeline_mode = #tpu.pipeline_mode<synchronous>, transform_indices = @transform_3, window_bounds = array<i64: 32, 16>}, {pipeline_mode = #tpu.pipeline_mode<synchronous>, transform_indices = @transform_4, window_bounds = array<i64: 32, 1>}, {pipeline_mode = #tpu.pipeline_mode<synchronous>, transform_indices = @transform_5, window_bounds = array<i64: 32, 32>}, {pipeline_mode = #tpu.pipeline_mode<synchronous>, transform_indices = @transform_6, window_bounds = array<i64: 32, 1>}, {pipeline_mode = #tpu.pipeline_mode<synchronous>, transform_indices = @transform_7, window_bounds = array<i64: 8, 32>}, {pipeline_mode = #tpu.pipeline_mode<synchronous>, transform_indices = @transform_8, window_bounds = array<i64: 8, 1>}, {transform_indices = @transform_9, window_bounds = array<i64: 8, 128>}]} {
    %c0 = arith.constant 0 : index
    %c0_0 = arith.constant 0 : index
    %0 = vector.load %arg2[%c0, %c0_0] : memref<16x4xf32, #tpu.memory_space<vmem>>, vector<16x4xf32>
    %c0_1 = arith.constant 0 : index
    %c0_2 = arith.constant 0 : index
    %1 = vector.load %arg3[%c0_1, %c0_2] : memref<16x1xf32, #tpu.memory_space<vmem>>, vector<16x1xf32>
    %c0_3 = arith.constant 0 : index
    %c0_4 = arith.constant 0 : index
    %2 = vector.load %arg4[%c0_3, %c0_4] : memref<32x16xf32, #tpu.memory_space<vmem>>, vector<32x16xf32>
    %c0_5 = arith.constant 0 : index
    %c0_6 = arith.constant 0 : index
    %3 = vector.load %arg5[%c0_5, %c0_6] : memref<32x1xf32, #tpu.memory_space<vmem>>, vector<32x1xf32>
    %c0_7 = arith.constant 0 : index
    %c0_8 = arith.constant 0 : index
    %4 = vector.load %arg6[%c0_7, %c0_8] : memref<32x32xf32, #tpu.memory_space<vmem>>, vector<32x32xf32>
    %c0_9 = arith.constant 0 : index
    %c0_10 = arith.constant 0 : index
    %5 = vector.load %arg7[%c0_9, %c0_10] : memref<32x1xf32, #tpu.memory_space<vmem>>, vector<32x1xf32>
    %c0_11 = arith.constant 0 : index
    %c0_12 = arith.constant 0 : index
    %6 = vector.load %arg8[%c0_11, %c0_12] : memref<8x32xf32, #tpu.memory_space<vmem>>, vector<8x32xf32>
    %c0_13 = arith.constant 0 : index
    %c0_14 = arith.constant 0 : index
    %7 = vector.load %arg9[%c0_13, %c0_14] : memref<8x1xf32, #tpu.memory_space<vmem>>, vector<8x1xf32>
    %c0_i32 = arith.constant 0 : i32
    %c128_i32 = arith.constant 128 : i32
    %8 = arith.muli %c0_i32, %c128_i32 : i32
    %9 = tpu.assume_multiple %8, 128 : i32
    %c0_15 = arith.constant 0 : index
    %10 = arith.index_cast %9 : i32 to index
    %11 = vector.load %arg1[%c0_15, %10] : memref<4x128xf32, #tpu.memory_space<vmem>>, vector<4x128xf32>
    %cst = arith.constant dense<0.000000e+00> : vector<16x128xf32>
    %12 = tpu.matmul %0, %11, %cst {dimension_numbers = #tpu.dot_dimension_numbers<[1], [0], [0], [1], [0, 0, 1, 1], [], []>} : vector<16x4xf32>, vector<4x128xf32>, vector<16x128xf32> -> vector<16x128xf32>
    %13 = vector.broadcast %1 : vector<16x1xf32> to vector<16x128xf32>
    %14 = arith.addf %12, %13 : vector<16x128xf32>
    %cst_16 = arith.constant 0.000000e+00 : f32
    %15 = vector.broadcast %cst_16 : f32 to vector<16x128xf32>
    %16 = arith.maximumf %14, %15 : vector<16x128xf32>
    %cst_17 = arith.constant dense<0.000000e+00> : vector<32x128xf32>
    %17 = tpu.matmul %2, %16, %cst_17 {dimension_numbers = #tpu.dot_dimension_numbers<[1], [0], [0], [1], [0, 0, 1, 1], [], []>} : vector<32x16xf32>, vector<16x128xf32>, vector<32x128xf32> -> vector<32x128xf32>
    %18 = vector.broadcast %3 : vector<32x1xf32> to vector<32x128xf32>
    %19 = arith.addf %17, %18 : vector<32x128xf32>
    %cst_18 = arith.constant 0.000000e+00 : f32
    %20 = vector.broadcast %cst_18 : f32 to vector<32x128xf32>
    %21 = arith.maximumf %19, %20 : vector<32x128xf32>
    %cst_19 = arith.constant dense<0.000000e+00> : vector<32x128xf32>
    %22 = tpu.matmul %4, %21, %cst_19 {dimension_numbers = #tpu.dot_dimension_numbers<[1], [0], [0], [1], [0, 0, 1, 1], [], []>} : vector<32x32xf32>, vector<32x128xf32>, vector<32x128xf32> -> vector<32x128xf32>
    %23 = vector.broadcast %5 : vector<32x1xf32> to vector<32x128xf32>
    %24 = arith.addf %22, %23 : vector<32x128xf32>
    %cst_20 = arith.constant 0.000000e+00 : f32
    %25 = vector.broadcast %cst_20 : f32 to vector<32x128xf32>
    %26 = arith.maximumf %24, %25 : vector<32x128xf32>
    %cst_21 = arith.constant dense<0.000000e+00> : vector<8x128xf32>
    %27 = tpu.matmul %6, %26, %cst_21 {dimension_numbers = #tpu.dot_dimension_numbers<[1], [0], [0], [1], [0, 0, 1, 1], [], []>} : vector<8x32xf32>, vector<32x128xf32>, vector<8x128xf32> -> vector<8x128xf32>
    %28 = vector.broadcast %7 : vector<8x1xf32> to vector<8x128xf32>
    %29 = arith.addf %27, %28 : vector<8x128xf32>
    %c0_22 = arith.constant 0 : index
    %30 = arith.index_cast %9 : i32 to index
    %31 = vector.load %arg10[%c0_22, %30] : memref<8x128xf32, #tpu.memory_space<vmem>>, vector<8x128xf32>
    tpu.vector_store %arg10[%c0_22, %30], %29 {strides = array<i32>} : memref<8x128xf32, #tpu.memory_space<vmem>>, vector<8x128xf32>,
    %c1_i32 = arith.constant 1 : i32
    return
  }
  func.func @transform_0(%arg0: i32) -> (i32, i32) {
    %c0_i32 = arith.constant 0 : i32
    %c0_i32_0 = arith.constant 0 : i32
    return %c0_i32, %arg0 : i32, i32
  }
  func.func @transform_1(%arg0: i32) -> (i32, i32) {
    %c0_i32 = arith.constant 0 : i32
    %c0_i32_0 = arith.constant 0 : i32
    %c0_i32_1 = arith.constant 0 : i32
    return %c0_i32, %c0_i32_0 : i32, i32
  }
  func.func @transform_2(%arg0: i32) -> (i32, i32) {
    %c0_i32 = arith.constant 0 : i32
    %c0_i32_0 = arith.constant 0 : i32
    %c0_i32_1 = arith.constant 0 : i32
    return %c0_i32, %c0_i32_0 : i32, i32
  }
  func.func @transform_3(%arg0: i32) -> (i32, i32) {
    %c0_i32 = arith.constant 0 : i32
    %c0_i32_0 = arith.constant 0 : i32
    %c0_i32_1 = arith.constant 0 : i32
    return %c0_i32, %c0_i32_0 : i32, i32
  }
  func.func @transform_4(%arg0: i32) -> (i32, i32) {
    %c0_i32 = arith.constant 0 : i32
    %c0_i32_0 = arith.constant 0 : i32
    %c0_i32_1 = arith.constant 0 : i32
    return %c0_i32, %c0_i32_0 : i32, i32
  }
  func.func @transform_5(%arg0: i32) -> (i32, i32) {
    %c0_i32 = arith.constant 0 : i32
    %c0_i32_0 = arith.constant 0 : i32
    %c0_i32_1 = arith.constant 0 : i32
    return %c0_i32, %c0_i32_0 : i32, i32
  }
  func.func @transform_6(%arg0: i32) -> (i32, i32) {
    %c0_i32 = arith.constant 0 : i32
    %c0_i32_0 = arith.constant 0 : i32
    %c0_i32_1 = arith.constant 0 : i32
    return %c0_i32, %c0_i32_0 : i32, i32
  }
  func.func @transform_7(%arg0: i32) -> (i32, i32) {
    %c0_i32 = arith.constant 0 : i32
    %c0_i32_0 = arith.constant 0 : i32
    %c0_i32_1 = arith.constant 0 : i32
    return %c0_i32, %c0_i32_0 : i32, i32
  }
  func.func @transform_8(%arg0: i32) -> (i32, i32) {
    %c0_i32 = arith.constant 0 : i32
    %c0_i32_0 = arith.constant 0 : i32
    %c0_i32_1 = arith.constant 0 : i32
    return %c0_i32, %c0_i32_0 : i32, i32
  }
  func.func @transform_9(%arg0: i32) -> (i32, i32) {
    %c0_i32 = arith.constant 0 : i32
    %c0_i32_0 = arith.constant 0 : i32
    return %c0_i32, %arg0 : i32, i32
  }
}

</mosaic_0001>

<llo_original>
// kernel: cnn_forward.1
$region0: #{cnn_forward.1}
  #allocation0 [shape = 'u32[]', space=smem, size = 0x4, offset = 0x4, fixed_abs, tag = 'smem constant byte address 0x4 - core index']
  #allocation1 [shape = 'u32[144,128]{1,0:T(1,128)}', space=vmem, size = 0x12000, scoped, tag = 'internal scratch']
  %s0 = inlined_call_operand.vmem [shape: f32[4,128], index: 0, kind: input, shape index: {}]
  %s1 = inlined_call_operand.vmem [shape: f32[16,4], index: 1, kind: input, shape index: {}]
  %s2 = inlined_call_operand.vmem [shape: f32[16,1], index: 2, kind: input, shape index: {}]
  %s3 = inlined_call_operand.vmem [shape: f32[32,16], index: 3, kind: input, shape index: {}]
  %s4 = inlined_call_operand.vmem [shape: f32[32,1], index: 4, kind: input, shape index: {}]
  %s5 = inlined_call_operand.vmem [shape: f32[32,32], index: 5, kind: input, shape index: {}]
  %s6 = inlined_call_operand.vmem [shape: f32[32,1], index: 6, kind: input, shape index: {}]
  %s7 = inlined_call_operand.vmem [shape: f32[8,32], index: 7, kind: input, shape index: {}]
  %s8 = inlined_call_operand.vmem [shape: f32[8,1], index: 8, kind: input, shape index: {}]
  %s9 = inlined_call_operand.vmem [shape: f32[8,128], index: 9, kind: output, shape index: {}]
  %s10 = sld [smem:[#allocation0]]
  $region46: #{cnn_forward.1} parent=0
    _
  %s12 = ssub.s32 1, %s10
  %s13 = scalar_select 0, %s12, %s10
  // Predicated region
  $region2: #{cnn_forward.1} parent=0 // pred_check
    _
  $region3: #{cnn_forward.1} parent=0 // pred_check_branch
    %15 = sbr.rel (0) target = $region5
  $region4: #{cnn_forward.1} parent=0 // pred_region
    _
  $region5: #{cnn_forward.1} parent=0 // pred_fallthru
    _
  // Predicated region
  $region6: #{cnn_forward.1} parent=0 // pred_check
    _
  $region7: #{cnn_forward.1} parent=0 // pred_check_branch
    %17 = sbr.rel (0) target = $region9
  $region8: #{cnn_forward.1} parent=0 // pred_region
    _
  $region9: #{cnn_forward.1} parent=0 // pred_fallthru
    _
  // Predicated region
  $region10: #{cnn_forward.1} parent=0 // pred_check
    _
  $region11: #{cnn_forward.1} parent=0 // pred_check_branch
    %19 = sbr.rel (0) target = $region13
  $region12: #{cnn_forward.1} parent=0 // pred_region
    _
  $region13: #{cnn_forward.1} parent=0 // pred_fallthru
    _
  // Predicated region
  $region14: #{cnn_forward.1} parent=0 // pred_check
    _
  $region15: #{cnn_forward.1} parent=0 // pred_check_branch
    %21 = sbr.rel (0) target = $region17
  $region16: #{cnn_forward.1} parent=0 // pred_region
    _
  $region17: #{cnn_forward.1} parent=0 // pred_fallthru
    _
  // Predicated region
  $region18: #{cnn_forward.1} parent=0 // pred_check
    _
  $region19: #{cnn_forward.1} parent=0 // pred_check_branch
    %23 = sbr.rel (0) target = $region21
  $region20: #{cnn_forward.1} parent=0 // pred_region
    _
  $region21: #{cnn_forward.1} parent=0 // pred_fallthru
    _
  // Predicated region
  $region22: #{cnn_forward.1} parent=0 // pred_check
    _
  $region23: #{cnn_forward.1} parent=0 // pred_check_branch
    %25 = sbr.rel (0) target = $region25
  $region24: #{cnn_forward.1} parent=0 // pred_region
    _
  $region25: #{cnn_forward.1} parent=0 // pred_fallthru
    _
  // Predicated region
  $region26: #{cnn_forward.1} parent=0 // pred_check
    _
  $region27: #{cnn_forward.1} parent=0 // pred_check_branch
    %27 = sbr.rel (0) target = $region29
  $region28: #{cnn_forward.1} parent=0 // pred_region
    _
  $region29: #{cnn_forward.1} parent=0 // pred_fallthru
    _
  // Predicated region
  $region30: #{cnn_forward.1} parent=0 // pred_check
    _
  $region31: #{cnn_forward.1} parent=0 // pred_check_branch
    %29 = sbr.rel (0) target = $region33
  $region32: #{cnn_forward.1} parent=0 // pred_region
    _
  $region33: #{cnn_forward.1} parent=0 // pred_fallthru
    _
  // Predicated region
  $region34: #{cnn_forward.1} parent=0 // pred_check
    _
  $region35: #{cnn_forward.1} parent=0 // pred_check_branch
    %31 = sbr.rel (0) target = $region37
  $region36: #{cnn_forward.1} parent=0 // pred_region
    _
  $region37: #{cnn_forward.1} parent=0 // pred_fallthru
    _
  %v32 = vld [vmem:[%s1] sm:$0xff]
  %v33 = vld [vmem:[%s1 + $0x8] sm:$0xff]
  %v34 = vld [vmem:[%s2] sm:$0xff]
  %v35 = vld [vmem:[%s2 + $0x8] sm:$0xff]
  %v36 = vld [vmem:[%s3] sm:$0xff]
  %v37 = vld [vmem:[%s3 + $0x8] sm:$0xff]
  %v38 = vld [vmem:[%s3 + $0x10] sm:$0xff]
  %v39 = vld [vmem:[%s3 + $0x18] sm:$0xff]
  %v40 = vld [vmem:[%s4] sm:$0xff]
  %v41 = vld [vmem:[%s4 + $0x8] sm:$0xff]
  %v42 = vld [vmem:[%s4 + $0x10] sm:$0xff]
  %v43 = vld [vmem:[%s4 + $0x18] sm:$0xff]
  %v44 = vld [vmem:[%s5] sm:$0xff]
  %v45 = vld [vmem:[%s5 + $0x8] sm:$0xff]
  %v46 = vld [vmem:[%s5 + $0x10] sm:$0xff]
  %v47 = vld [vmem:[%s5 + $0x18] sm:$0xff]
  %v48 = vld [vmem:[%s6] sm:$0xff]
  %v49 = vld [vmem:[%s6 + $0x8] sm:$0xff]
  %v50 = vld [vmem:[%s6 + $0x10] sm:$0xff]
  %v51 = vld [vmem:[%s6 + $0x18] sm:$0xff]
  %v52 = vld [vmem:[%s7] sm:$0xff]
  %v53 = vld [vmem:[%s8] sm:$0xff]
  %v54 = vld [vmem:[%s0] sm:$0xf]
  %56 = vset.pattern.permute.xlu0 0
  %57 = vperm.xlu0 %56, %v34
  %v58 = vpop.permute.xlu0 %57
  %61 = vset.pattern.permute.xlu0 0
  %62 = vperm.xlu0 %61, %v35
  %v63 = vpop.permute.xlu0 %62
  %vm65 = vcmask 31744
  %v67 = vsel %vm65, %v32, 0
  %v70 = vsel %vm65, %v33, 0
  %vm72 = vcmask 1043456
  %v74 = vsel %vm72, %v54, 0
  %76 = vmatprep.subr.mxu0 0.0
  %77 = vmatpush1.msra.mxu0 0.0
  %78 = vmatprep.subr.mxu0 0.0
  %79 = vmatpush1.msra.mxu0 0.0
  %80 = vmatprep.subr.mxu0 0.0
  %81 = vmatpush1.msra.mxu0 0.0
  %82 = vmatprep.subr.mxu0 0.0
  %83 = vmatpush1.msra.mxu0 0.0
  %84 = vmatprep.subr.mxu0 0.0
  %85 = vmatpush1.msra.mxu0 0.0
  %86 = vmatprep.subr.mxu0 0.0
  %87 = vmatpush1.msra.mxu0 0.0
  %88 = vmatprep.subr.mxu0 0.0
  %89 = vmatpush1.msra.mxu0 0.0
  %90 = vmatprep.subr.mxu0 0.0
  %91 = vmatpush1.msra.mxu0 0.0
  %92 = vmatprep.subr.mxu0 0.0
  %93 = vmatpush1.msra.mxu0 0.0
  %94 = vmatprep.subr.mxu0 0.0
  %95 = vmatpush1.msra.mxu0 0.0
  %96 = vmatprep.subr.mxu0 0.0
  %97 = vmatpush1.msra.mxu0 0.0
  %98 = vmatprep.subr.mxu0 0.0
  %99 = vmatpush1.msra.mxu0 0.0
  %100 = vmatprep.subr.mxu0 0.0
  %101 = vmatpush1.msra.mxu0 0.0
  %102 = vmatprep.subr.mxu0 0.0
  %103 = vmatpush1.msra.mxu0 0.0
  %104 = vmatprep.subr.mxu0 0.0
  %105 = vmatpush1.msra.mxu0 0.0
  %106 = vmatprep.subr.mxu0 0.0
  %107 = vmatpush1.msra.mxu0 %v74
  %108 = vmatprep.subr.mxu0 0.0
  %109 = vmatpush2.msra.mxu0 0.0
  %110 = vmatprep.subr.mxu0 0.0
  %111 = vmatpush2.msra.mxu0 0.0
  %112 = vmatprep.subr.mxu0 0.0
  %113 = vmatpush2.msra.mxu0 0.0
  %114 = vmatprep.subr.mxu0 0.0
  %115 = vmatpush2.msra.mxu0 0.0
  %116 = vmatprep.subr.mxu0 0.0
  %117 = vmatpush2.msra.mxu0 0.0
  %118 = vmatprep.subr.mxu0 0.0
  %119 = vmatpush2.msra.mxu0 0.0
  %120 = vmatprep.subr.mxu0 0.0
  %121 = vmatpush2.msra.mxu0 0.0
  %122 = vmatprep.subr.mxu0 0.0
  %123 = vmatpush2.msra.mxu0 0.0
  %124 = vmatprep.subr.mxu0 0.0
  %125 = vmatpush2.msra.mxu0 0.0
  %126 = vmatprep.subr.mxu0 0.0
  %127 = vmatpush2.msra.mxu0 0.0
  %128 = vmatprep.subr.mxu0 0.0
  %129 = vmatpush2.msra.mxu0 0.0
  %130 = vmatprep.subr.mxu0 0.0
  %131 = vmatpush2.msra.mxu0 0.0
  %132 = vmatprep.subr.mxu0 0.0
  %133 = vmatpush2.msra.mxu0 0.0
  %134 = vmatprep.subr.mxu0 0.0
  %135 = vmatpush2.msra.mxu0 0.0
  %136 = vmatprep.subr.mxu0 0.0
  %137 = vmatpush2.msra.mxu0 0.0
  %138 = vmatprep.subr.mxu0 0.0
  %139 = vmatpush2.msra.mxu0 0.0
  %140 = vmatprep.mubr.f32.mxu0 0.0
  %141 = vmatmul.mubr.f32.gmra.mxu0 %v67
  %v142 = vpop.f32.mrf.mxu0
  %v143 = vadd.f32 %v58, %v142
  %v144 = vpop.f32.mrf.mxu0
  %145 = vmatprep.mubr.f32.mxu0 0.0
  %146 = vmatmul.mubr.f32.gmra.mxu0 %v70
  %v147 = vpop.f32.mrf.mxu0
  %v148 = vadd.f32 %v63, %v147
  %v149 = vpop.f32.mrf.mxu0
  %150 = vdwg.mxu0
  %v151 = vmax.f32 %v143, 0.0
  %v152 = vmax.f32 %v148, 0.0
  %154 = vset.pattern.permute.xlu0 0
  %155 = vperm.xlu0 %154, %v40
  %v156 = vpop.permute.xlu0 %155
  %159 = vset.pattern.permute.xlu0 0
  %160 = vperm.xlu0 %159, %v41
  %v161 = vpop.permute.xlu0 %160
  %164 = vset.pattern.permute.xlu0 0
  %165 = vperm.xlu0 %164, %v42
  %v166 = vpop.permute.xlu0 %165
  %169 = vset.pattern.permute.xlu0 0
  %170 = vperm.xlu0 %169, %v43
  %v171 = vpop.permute.xlu0 %170
  %vm173 = vcmask 130048
  %v175 = vsel %vm173, %v36, 0
  %v178 = vsel %vm173, %v37, 0
  %v181 = vsel %vm173, %v38, 0
  %v184 = vsel %vm173, %v39, 0
  %186 = vmatprep.subr.mxu0 0.0
  %187 = vmatpush1.msra.mxu0 0.0
  %188 = vmatprep.subr.mxu0 0.0
  %189 = vmatpush1.msra.mxu0 0.0
  %190 = vmatprep.subr.mxu0 0.0
  %191 = vmatpush1.msra.mxu0 0.0
  %192 = vmatprep.subr.mxu0 0.0
  %193 = vmatpush1.msra.mxu0 0.0
  %194 = vmatprep.subr.mxu0 0.0
  %195 = vmatpush1.msra.mxu0 0.0
  %196 = vmatprep.subr.mxu0 0.0
  %197 = vmatpush1.msra.mxu0 0.0
  %198 = vmatprep.subr.mxu0 0.0
  %199 = vmatpush1.msra.mxu0 0.0
  %200 = vmatprep.subr.mxu0 0.0
  %201 = vmatpush1.msra.mxu0 0.0
  %202 = vmatprep.subr.mxu0 0.0
  %203 = vmatpush1.msra.mxu0 0.0
  %204 = vmatprep.subr.mxu0 0.0
  %205 = vmatpush1.msra.mxu0 0.0
  %206 = vmatprep.subr.mxu0 0.0
  %207 = vmatpush1.msra.mxu0 0.0
  %208 = vmatprep.subr.mxu0 0.0
  %209 = vmatpush1.msra.mxu0 0.0
  %210 = vmatprep.subr.mxu0 0.0
  %211 = vmatpush1.msra.mxu0 0.0
  %212 = vmatprep.subr.mxu0 0.0
  %213 = vmatpush1.msra.mxu0 0.0
  %214 = vmatprep.subr.mxu0 0.0
  %215 = vmatpush1.msra.mxu0 %v152
  %216 = vmatprep.subr.mxu0 0.0
  %217 = vmatpush1.msra.mxu0 %v151
  %218 = vmatprep.subr.mxu0 0.0
  %219 = vmatpush2.msra.mxu0 0.0
  %220 = vmatprep.subr.mxu0 0.0
  %221 = vmatpush2.msra.mxu0 0.0
  %222 = vmatprep.subr.mxu0 0.0
  %223 = vmatpush2.msra.mxu0 0.0
  %224 = vmatprep.subr.mxu0 0.0
  %225 = vmatpush2.msra.mxu0 0.0
  %226 = vmatprep.subr.mxu0 0.0
  %227 = vmatpush2.msra.mxu0 0.0
  %228 = vmatprep.subr.mxu0 0.0
  %229 = vmatpush2.msra.mxu0 0.0
  %230 = vmatprep.subr.mxu0 0.0
  %231 = vmatpush2.msra.mxu0 0.0
  %232 = vmatprep.subr.mxu0 0.0
  %233 = vmatpush2.msra.mxu0 0.0
  %234 = vmatprep.subr.mxu0 0.0
  %235 = vmatpush2.msra.mxu0 0.0
  %236 = vmatprep.subr.mxu0 0.0
  %237 = vmatpush2.msra.mxu0 0.0
  %238 = vmatprep.subr.mxu0 0.0
  %239 = vmatpush2.msra.mxu0 0.0
  %240 = vmatprep.subr.mxu0 0.0
  %241 = vmatpush2.msra.mxu0 0.0
  %242 = vmatprep.subr.mxu0 0.0
  %243 = vmatpush2.msra.mxu0 0.0
  %244 = vmatprep.subr.mxu0 0.0
  %245 = vmatpush2.msra.mxu0 0.0
  %246 = vmatprep.subr.mxu0 0.0
  %247 = vmatpush2.msra.mxu0 0.0
  %248 = vmatprep.subr.mxu0 0.0
  %249 = vmatpush2.msra.mxu0 0.0
  %250 = vmatprep.mubr.f32.mxu0 0.0
  %251 = vmatmul.mubr.f32.gmra.mxu0 %v175
  %v252 = vpop.f32.mrf.mxu0
  %v253 = vadd.f32 %v156, %v252
  %v254 = vpop.f32.mrf.mxu0
  %255 = vmatprep.mubr.f32.mxu0 0.0
  %256 = vmatmul.mubr.f32.gmra.mxu0 %v178
  %v257 = vpop.f32.mrf.mxu0
  %v258 = vadd.f32 %v161, %v257
  %v259 = vpop.f32.mrf.mxu0
  %260 = vmatprep.mubr.f32.mxu0 0.0
  %261 = vmatmul.mubr.f32.gmra.mxu0 %v181
  %v262 = vpop.f32.mrf.mxu0
  %v263 = vadd.f32 %v166, %v262
  %v264 = vpop.f32.mrf.mxu0
  %265 = vmatprep.mubr.f32.mxu0 0.0
  %266 = vmatmul.mubr.f32.gmra.mxu0 %v184
  %v267 = vpop.f32.mrf.mxu0
  %v268 = vadd.f32 %v171, %v267
  %v269 = vpop.f32.mrf.mxu0
  %270 = vdwg.mxu0
  %v271 = vmax.f32 %v253, 0.0
  %v272 = vmax.f32 %v258, 0.0
  %v273 = vmax.f32 %v263, 0.0
  %v274 = vmax.f32 %v268, 0.0
  %276 = vset.pattern.permute.xlu0 0
  %277 = vperm.xlu0 %276, %v48
  %v278 = vpop.permute.xlu0 %277
  %281 = vset.pattern.permute.xlu0 0
  %282 = vperm.xlu0 %281, %v49
  %v283 = vpop.permute.xlu0 %282
  %286 = vset.pattern.permute.xlu0 0
  %287 = vperm.xlu0 %286, %v50
  %v288 = vpop.permute.xlu0 %287
  %291 = vset.pattern.permute.xlu0 0
  %292 = vperm.xlu0 %291, %v51
  %v293 = vpop.permute.xlu0 %292
  %vm295 = vcmask 261120
  %v297 = vsel %vm295, %v44, 0
  %v300 = vsel %vm295, %v45, 0
  %v303 = vsel %vm295, %v46, 0
  %v306 = vsel %vm295, %v47, 0
  %308 = vmatprep.subr.mxu0 0.0
  %309 = vmatpush1.msra.mxu0 0.0
  %310 = vmatprep.subr.mxu0 0.0
  %311 = vmatpush1.msra.mxu0 0.0
  %312 = vmatprep.subr.mxu0 0.0
  %313 = vmatpush1.msra.mxu0 0.0
  %314 = vmatprep.subr.mxu0 0.0
  %315 = vmatpush1.msra.mxu0 0.0
  %316 = vmatprep.subr.mxu0 0.0
  %317 = vmatpush1.msra.mxu0 0.0
  %318 = vmatprep.subr.mxu0 0.0
  %319 = vmatpush1.msra.mxu0 0.0
  %320 = vmatprep.subr.mxu0 0.0
  %321 = vmatpush1.msra.mxu0 0.0
  %322 = vmatprep.subr.mxu0 0.0
  %323 = vmatpush1.msra.mxu0 0.0
  %324 = vmatprep.subr.mxu0 0.0
  %325 = vmatpush1.msra.mxu0 0.0
  %326 = vmatprep.subr.mxu0 0.0
  %327 = vmatpush1.msra.mxu0 0.0
  %328 = vmatprep.subr.mxu0 0.0
  %329 = vmatpush1.msra.mxu0 0.0
  %330 = vmatprep.subr.mxu0 0.0
  %331 = vmatpush1.msra.mxu0 0.0
  %332 = vmatprep.subr.mxu0 0.0
  %333 = vmatpush1.msra.mxu0 %v274
  %334 = vmatprep.subr.mxu0 0.0
  %335 = vmatpush1.msra.mxu0 %v273
  %336 = vmatprep.subr.mxu0 0.0
  %337 = vmatpush1.msra.mxu0 %v272
  %338 = vmatprep.subr.mxu0 0.0
  %339 = vmatpush1.msra.mxu0 %v271
  %340 = vmatprep.subr.mxu0 0.0
  %341 = vmatpush2.msra.mxu0 0.0
  %342 = vmatprep.subr.mxu0 0.0
  %343 = vmatpush2.msra.mxu0 0.0
  %344 = vmatprep.subr.mxu0 0.0
  %345 = vmatpush2.msra.mxu0 0.0
  %346 = vmatprep.subr.mxu0 0.0
  %347 = vmatpush2.msra.mxu0 0.0
  %348 = vmatprep.subr.mxu0 0.0
  %349 = vmatpush2.msra.mxu0 0.0
  %350 = vmatprep.subr.mxu0 0.0
  %351 = vmatpush2.msra.mxu0 0.0
  %352 = vmatprep.subr.mxu0 0.0
  %353 = vmatpush2.msra.mxu0 0.0
  %354 = vmatprep.subr.mxu0 0.0
  %355 = vmatpush2.msra.mxu0 0.0
  %356 = vmatprep.subr.mxu0 0.0
  %357 = vmatpush2.msra.mxu0 0.0
  %358 = vmatprep.subr.mxu0 0.0
  %359 = vmatpush2.msra.mxu0 0.0
  %360 = vmatprep.subr.mxu0 0.0
  %361 = vmatpush2.msra.mxu0 0.0
  %362 = vmatprep.subr.mxu0 0.0
  %363 = vmatpush2.msra.mxu0 0.0
  %364 = vmatprep.subr.mxu0 0.0
  %365 = vmatpush2.msra.mxu0 0.0
  %366 = vmatprep.subr.mxu0 0.0
  %367 = vmatpush2.msra.mxu0 0.0
  %368 = vmatprep.subr.mxu0 0.0
  %369 = vmatpush2.msra.mxu0 0.0
  %370 = vmatprep.subr.mxu0 0.0
  %371 = vmatpush2.msra.mxu0 0.0
  %372 = vmatprep.mubr.f32.mxu0 0.0
  %373 = vmatmul.mubr.f32.gmra.mxu0 %v297
  %v374 = vpop.f32.mrf.mxu0
  %v375 = vadd.f32 %v278, %v374
  %v376 = vpop.f32.mrf.mxu0
  %377 = vmatprep.mubr.f32.mxu0 0.0
  %378 = vmatmul.mubr.f32.gmra.mxu0 %v300
  %v379 = vpop.f32.mrf.mxu0
  %v380 = vadd.f32 %v283, %v379
  %v381 = vpop.f32.mrf.mxu0
  %382 = vmatprep.mubr.f32.mxu0 0.0
  %383 = vmatmul.mubr.f32.gmra.mxu0 %v303
  %v384 = vpop.f32.mrf.mxu0
  %v385 = vadd.f32 %v288, %v384
  %v386 = vpop.f32.mrf.mxu0
  %387 = vmatprep.mubr.f32.mxu0 0.0
  %388 = vmatmul.mubr.f32.gmra.mxu0 %v306
  %v389 = vpop.f32.mrf.mxu0
  %v390 = vadd.f32 %v293, %v389
  %v391 = vpop.f32.mrf.mxu0
  %392 = vdwg.mxu0
  %v393 = vmax.f32 %v375, 0.0
  %v394 = vmax.f32 %v380, 0.0
  %v395 = vmax.f32 %v385, 0.0
  %v396 = vmax.f32 %v390, 0.0
  %398 = vset.pattern.permute.xlu0 0
  %399 = vperm.xlu0 %398, %v53
  %v400 = vpop.permute.xlu0 %399
  %v403 = vsel %vm295, %v52, 0
  %405 = vmatprep.subr.mxu0 0.0
  %406 = vmatpush1.msra.mxu0 0.0
  %407 = vmatprep.subr.mxu0 0.0
  %408 = vmatpush1.msra.mxu0 0.0
  %409 = vmatprep.subr.mxu0 0.0
  %410 = vmatpush1.msra.mxu0 0.0
  %411 = vmatprep.subr.mxu0 0.0
  %412 = vmatpush1.msra.mxu0 0.0
  %413 = vmatprep.subr.mxu0 0.0
  %414 = vmatpush1.msra.mxu0 0.0
  %415 = vmatprep.subr.mxu0 0.0
  %416 = vmatpush1.msra.mxu0 0.0
  %417 = vmatprep.subr.mxu0 0.0
  %418 = vmatpush1.msra.mxu0 0.0
  %419 = vmatprep.subr.mxu0 0.0
  %420 = vmatpush1.msra.mxu0 0.0
  %421 = vmatprep.subr.mxu0 0.0
  %422 = vmatpush1.msra.mxu0 0.0
  %423 = vmatprep.subr.mxu0 0.0
  %424 = vmatpush1.msra.mxu0 0.0
  %425 = vmatprep.subr.mxu0 0.0
  %426 = vmatpush1.msra.mxu0 0.0
  %427 = vmatprep.subr.mxu0 0.0
  %428 = vmatpush1.msra.mxu0 0.0
  %429 = vmatprep.subr.mxu0 0.0
  %430 = vmatpush1.msra.mxu0 %v396
  %431 = vmatprep.subr.mxu0 0.0
  %432 = vmatpush1.msra.mxu0 %v395
  %433 = vmatprep.subr.mxu0 0.0
  %434 = vmatpush1.msra.mxu0 %v394
  %435 = vmatprep.subr.mxu0 0.0
  %436 = vmatpush1.msra.mxu0 %v393
  %437 = vmatprep.subr.mxu0 0.0
  %438 = vmatpush2.msra.mxu0 0.0
  %439 = vmatprep.subr.mxu0 0.0
  %440 = vmatpush2.msra.mxu0 0.0
  %441 = vmatprep.subr.mxu0 0.0
  %442 = vmatpush2.msra.mxu0 0.0
  %443 = vmatprep.subr.mxu0 0.0
  %444 = vmatpush2.msra.mxu0 0.0
  %445 = vmatprep.subr.mxu0 0.0
  %446 = vmatpush2.msra.mxu0 0.0
  %447 = vmatprep.subr.mxu0 0.0
  %448 = vmatpush2.msra.mxu0 0.0
  %449 = vmatprep.subr.mxu0 0.0
  %450 = vmatpush2.msra.mxu0 0.0
  %451 = vmatprep.subr.mxu0 0.0
  %452 = vmatpush2.msra.mxu0 0.0
  %453 = vmatprep.subr.mxu0 0.0
  %454 = vmatpush2.msra.mxu0 0.0
  %455 = vmatprep.subr.mxu0 0.0
  %456 = vmatpush2.msra.mxu0 0.0
  %457 = vmatprep.subr.mxu0 0.0
  %458 = vmatpush2.msra.mxu0 0.0
  %459 = vmatprep.subr.mxu0 0.0
  %460 = vmatpush2.msra.mxu0 0.0
  %461 = vmatprep.subr.mxu0 0.0
  %462 = vmatpush2.msra.mxu0 0.0
  %463 = vmatprep.subr.mxu0 0.0
  %464 = vmatpush2.msra.mxu0 0.0
  %465 = vmatprep.subr.mxu0 0.0
  %466 = vmatpush2.msra.mxu0 0.0
  %467 = vmatprep.subr.mxu0 0.0
  %468 = vmatpush2.msra.mxu0 0.0
  %469 = vmatprep.mubr.f32.mxu0 0.0
  %470 = vmatmul.mubr.f32.gmra.mxu0 %v403
  %v471 = vpop.f32.mrf.mxu0
  %v472 = vadd.f32 %v400, %v471
  %v473 = vpop.f32.mrf.mxu0
  %474 = vdwg.mxu0
  %475 = vst [vmem:[%s9] sm:$0xff] %v472
  // Predicated region
  $region38: #{cnn_forward.1} parent=0 // pred_check
    _
  $region39: #{cnn_forward.1} parent=0 // pred_check_branch
    %477 = sbr.rel (0) target = $region41
  $region40: #{cnn_forward.1} parent=0 // pred_region
    _
  $region41: #{cnn_forward.1} parent=0 // pred_fallthru
    _
  // Predicated region
  $region42: #{cnn_forward.1} parent=0 // pred_check
    _
  $region43: #{cnn_forward.1} parent=0 // pred_check_branch
    %479 = sbr.rel (0) target = $region45
  $region44: #{cnn_forward.1} parent=0 // pred_region
    _
  $region45: #{cnn_forward.1} parent=0 // pred_fallthru
    _

</llo_original>
